<compile_context>
chip_gen: v7x
topology: tpu7x:2x2x1
jax: 0.10.0
libtpu: 0.0.40
codegen_flags: <defaults>
</compile_context>

<pallas_src>
import jax
import jax.numpy as jnp
from jax.experimental import pallas as pl
from jax.experimental.pallas import tpu as pltpu


_LABEL_LOSS_NAMES = ('labels_encoder', 'labels_decoder', 'labels_x0', 'labels_xt')
_OUT_LANES = 128


# ---------------------------------------------------------------------------
# In-kernel loss bodies (pure jnp on VMEM-resident f32 values).
# ---------------------------------------------------------------------------
def _label_losses_batched(x, t, gcount, n, *, ignore_index, size_average):
    """Soft cross-entropy of torch loss_labels, batched over a group.

    x, t: [gcount*n, C] f32 (gcount losses stacked along sublanes).
    Returns a list of gcount [1, 1] loss scalars.
    The heavy per-element work (log-softmax, -t*log p, row mask) is done once on
    the whole slab; only tiny scalar reductions are per-loss.
    """
    _, c = x.shape
    if ignore_index >= 0:
        col_ids = jax.lax.broadcasted_iota(jnp.int32, (1, c), 1)
        notice = col_ids != ignore_index                                # [1, C]
        # log-softmax over the "notice" columns only (matches torch: the ignored
        # column is sliced out BEFORE LogSoftmax(dim=1)).
        m = jnp.max(jnp.where(notice, x, -jnp.inf), axis=1, keepdims=True)
        z = x - m
        e = jnp.where(notice, jnp.exp(z), 0.0)
        lse = jnp.log(jnp.sum(e, axis=1, keepdims=True))                # [R, 1]
        log_softmax = z - lse
        # where (never mask * value) so a +/-inf logit in the ignored column can
        # never become inf * 0 = NaN.
        contrib = jnp.where(notice, -t * log_softmax, 0.0)              # [R, C]
        # Row mask via masked lane-reduce of the ignore column (no 1-lane slice).
        t_ign = jnp.sum(jnp.where(col_ids == ignore_index, t, 0.0),
                        axis=1, keepdims=True)                          # [R, 1]
        row_mask = (t_ign != 1.0).astype(jnp.float32)                   # [R, 1]
        row_loss = jnp.sum(contrib, axis=1, keepdims=True)              # [R, 1]
        row_loss_masked = row_loss * row_mask
        out = []
        for g in range(gcount):                     # static; tiny per-loss part
            sl = slice(g * n, (g + 1) * n)
            sum_all = jnp.sum(row_loss[sl], axis=(0, 1), keepdims=True)
            sum_masked = jnp.sum(row_loss_masked[sl], axis=(0, 1), keepdims=True)
            count = jnp.sum(row_mask[sl], axis=(0, 1), keepdims=True)
            # torch: if output.sum() == 0 -> 0 else mean(output[~ignored]).
            # row_loss >= 0 for one-hot targets so the exact == 0 compare is
            # stable; count == 0 with sum_all != 0 yields NaN exactly like
            # torch's mean over an empty selection.
            out.append(jnp.where(sum_all == 0.0, jnp.float32(0.0),
                                 sum_masked / count))
        return out
    else:
        m = jnp.max(x, axis=1, keepdims=True)
        z = x - m
        lse = jnp.log(jnp.sum(jnp.exp(z), axis=1, keepdims=True))
        row_loss = jnp.sum(-t * (z - lse), axis=1, keepdims=True)       # [R, 1]
        out = []
        for g in range(gcount):
            sl = slice(g * n, (g + 1) * n)
            total = jnp.sum(row_loss[sl], axis=(0, 1), keepdims=True)
            out.append(total / jnp.float32(n) if size_average else total)
        return out


def _contrastive_2d(x1, x2, lab, *, margin):
    """Hadsell-Chopra-LeCun contrastive loss -> [1, 1]."""
    n = x1.shape[0]
    diff = x1 - x2 + jnp.float32(1e-6)          # F.pairwise_distance eps
    d = jnp.sqrt(jnp.sum(diff * diff, axis=1, keepdims=True))           # [N, 1]
    hinge = jnp.maximum(jnp.float32(margin) - d, jnp.float32(0.0))
    per = (1.0 - lab) * (d * d) + lab * (hinge * hinge)                 # [N, 1]
    denom = jnp.float32(n * lab.shape[1])
    return jnp.sum(per, axis=(0, 1), keepdims=True) / denom


# ---------------------------------------------------------------------------
# Fused criterion kernel: grouped label losses (+ optional contrastive).
# ---------------------------------------------------------------------------
def _build_criterion_kernel(group_shapes, has_contrastive, *, ignore_index,
                            size_average, margin):
    def kernel(*refs):
        idx = 0
        vals = []
        for (gcount, n, _) in group_shapes:
            xs, ts = [], []
            for _ in range(gcount):
                xs.append(refs[idx][...].astype(jnp.float32)); idx += 1
                ts.append(refs[idx][...].astype(jnp.float32)); idx += 1
            # In-kernel concat along sublanes (groups are sublane-aligned by
            # construction), so the log-softmax pass is issued once per group.
            x = xs[0] if gcount == 1 else jnp.concatenate(xs, axis=0)
            t = ts[0] if gcount == 1 else jnp.concatenate(ts, axis=0)
            vals.extend(_label_losses_batched(
                x, t, gcount, n, ignore_index=ignore_index,
                size_average=size_average))
        if has_contrastive:
            x1 = refs[idx][...].astype(jnp.float32); idx += 1
            x2 = refs[idx][...].astype(jnp.float32); idx += 1
            lab = refs[idx][...].astype(jnp.float32); idx += 1
            vals.append(_contrastive_2d(x1, x2, lab, margin=margin))
        out_ref = refs[idx]
        # Lane-major assembly: scalar i -> lane i of a single (1, 128) vreg row,
        # then one full-tile unmasked store of the broadcast (8, 128) tile.
        col_ids = jax.lax.broadcasted_iota(jnp.int32, (1, _OUT_LANES), 1)
        row = jnp.zeros((1, _OUT_LANES), jnp.float32)
        for i, v in enumerate(vals):                 # v: [1, 1], broadcasts
            row = jnp.where(col_ids == i, v, row)
        out_ref[...] = jnp.broadcast_to(row, (8, _OUT_LANES))
    return kernel


def _run_fused_criterion(label_groups, contrastive, *, ignore_index,
                         size_average, margin):
    """label_groups: list of groups; each group is a list of (logits[N,C],
    targets[N,C]) pairs with identical shape inside the group (no host stacking
    -- every tensor is its own VMEM ref).  contrastive: (x1, x2, lab[N,1]) or
    None.  Returns a 1-D f32 array of per-loss scalars (group order, then
    distance)."""
    inputs = []
    group_shapes = []
    for group in label_groups:
        n, c = group[0][0].shape
        group_shapes.append((len(group), n, c))
        for logits, tgt in group:
            inputs += [logits, tgt]
    has_contrastive = contrastive is not None
    if has_contrastive:
        inputs += list(contrastive)
    num_vals = sum(g for g, _, _ in group_shapes) + int(has_contrastive)
    assert num_vals > 0, "nothing to compute"
    assert num_vals <= _OUT_LANES

    kernel = _build_criterion_kernel(
        group_shapes, has_contrastive, ignore_index=ignore_index,
        size_average=size_average, margin=float(margin))

    vmem = pltpu.MemorySpace.VMEM
    out = pl.pallas_call(
        kernel,
        in_specs=[pl.BlockSpec(memory_space=vmem)] * len(inputs),
        out_specs=pl.BlockSpec(memory_space=vmem),
        out_shape=jax.ShapeDtypeStruct((8, _OUT_LANES), jnp.float32),
    )(*inputs)
    # Contiguous lane read of the first row.
    return out[0, :num_vals]


# ---------------------------------------------------------------------------
# SetCriterion forward (JAX/Pallas).  No learnable parameters.
# ---------------------------------------------------------------------------
class SetCriterionPallas:
    def __init__(self, num_classes, losses, *, margin=1.0,
                 classification_x_loss_coef=1.0, classification_h_loss_coef=1.0,
                 classification_pred_loss_coef=1.0, similar_loss_coef=1.0):
        self.num_classes = num_classes
        self.losses = list(losses)
        self.ignore_index = 21 if num_classes == 21 else -1
        self.margin = margin
        self.size_average = True
        # mirrors the torch module; not used inside forward()
        self.weight_dict = {
            'labels_encoder': classification_h_loss_coef,
            'labels_decoder': classification_pred_loss_coef,
            'labels_x0': classification_x_loss_coef,
            'labels_xt': classification_x_loss_coef,
            'distance': similar_loss_coef,
        }

    # --- per-loss API kept for parity with the torch module -----------------
    def loss_labels(self, input, targets, name):
        vals = _run_fused_criterion(
            [[(jnp.asarray(input), jnp.asarray(targets))]], None,
            ignore_index=self.ignore_index, size_average=self.size_average,
            margin=self.margin)
        return {name: vals[0]}

    loss_labels_decoder = loss_labels

    def contrastive_loss(self, output, label, name):
        out1, out2 = output
        out1 = jnp.asarray(out1)
        lab = jnp.asarray(label).reshape(out1.shape[0], 1)
        vals = _run_fused_criterion(
            [], (out1, jnp.asarray(out2), lab),
            ignore_index=self.ignore_index, size_average=self.size_average,
            margin=self.margin)
        # TODO(synk): torch casts this loss to float64 (.double()); kept f32 on TPU.
        return {name: vals[0]}

    def get_loss(self, loss, outputs, targets):
        loss_map = {
            'labels_encoder': self.loss_labels,
            'labels_decoder': self.loss_labels_decoder,
            'labels_x0': self.loss_labels,
            'labels_xt': self.loss_labels,
            'distance': self.contrastive_loss,
        }
        assert loss in loss_map, f'do you really want to compute {loss} loss?'
        return loss_map[loss](outputs, targets, name=loss)

    # --- fused forward: one pallas_call for the whole criterion -------------
    def forward(self, outputs, targets):
        known = set(_LABEL_LOSS_NAMES) | {'distance'}
        for loss in self.losses:
            assert loss in known, f'do you really want to compute {loss} loss?'

        # Group label losses by (N, C) so the kernel can batch them; shapes with
        # a non-sublane-aligned row count stay singleton (still same launch).
        groups = {}
        order = []
        uniq = 0
        for name in self.losses:
            if name == 'distance':
                continue
            logits = jnp.asarray(outputs[name])          # native dtype, no cast
            tgt = jnp.asarray(targets[name])             # native dtype, no cast
            shape = tuple(logits.shape)
            key = shape if shape[0] % 8 == 0 else ('solo', uniq)
            uniq += 1 if key == ('solo', uniq) else 0
            if key not in groups:
                groups[key] = []
                order.append(key)
            groups[key].append((name, logits, tgt))

        contrastive = None
        if 'distance' in self.losses:
            out1, out2 = outputs['distance']
            out1 = jnp.asarray(out1)
            lab = jnp.asarray(targets['distance']).reshape(out1.shape[0], 1)
            contrastive = (out1, jnp.asarray(out2), lab)

        names = []
        label_groups = []
        for key in order:
            items = groups[key]
            names.extend(n for n, _, _ in items)
            label_groups.append([(l, t) for _, l, t in items])

        if not names and contrastive is None:
            return {}

        vals = _run_fused_criterion(
            label_groups, contrastive, ignore_index=self.ignore_index,
            size_average=self.size_average, margin=self.margin)

        losses = {n: vals[i] for i, n in enumerate(names)}
        if contrastive is not None:
            # TODO(synk): torch casts 'distance' to float64; kept float32 on TPU.
            losses['distance'] = vals[len(names)]
        return losses

    __call__ = forward


# ---------------------------------------------------------------------------
# Pure-JAX references (used only for the in-script correctness check).
# ---------------------------------------------------------------------------
def _ref_label_loss(x, t, ignore_index, size_average=True):
    x = jnp.asarray(x, jnp.float32)
    t = jnp.asarray(t, jnp.float32)
    if ignore_index >= 0:
        notice = jnp.asarray([i for i in range(t.shape[-1]) if i != ignore_index])
        ls = jax.nn.log_softmax(x[:, notice], axis=1)
        output = jnp.sum(-t[:, notice] * ls, axis=1)
        mask = (t[:, ignore_index] != 1).astype(jnp.float32)
        masked_mean = jnp.sum(output * mask) / jnp.sum(mask)
        return jnp.where(jnp.sum(output) == 0.0, 0.0, masked_mean)
    ls = jax.nn.log_softmax(x, axis=1)
    output = jnp.sum(-t * ls, axis=1)
    return jnp.mean(output) if size_average else jnp.sum(output)


def _ref_contrastive(x1, x2, lab, margin):
    d = jnp.sqrt(jnp.sum((x1 - x2 + 1e-6) ** 2, axis=1, keepdims=True))
    per = (1.0 - lab) * d ** 2 + lab * jnp.maximum(margin - d, 0.0) ** 2
    return jnp.mean(per)


# ---------------------------------------------------------------------------
if __name__ == "__main__":
    key = jax.random.PRNGKey(0)

    num_classes = 21            # -> ignore_index = 21 (THUMOS-style config)
    C = num_classes + 1         # 22 classes incl. background/no-action column
    N = 8                       # batch * sequence rows
    D = 32                      # embedding dim for the contrastive branch

    losses = ['labels_encoder', 'labels_decoder', 'labels_x0', 'labels_xt', 'distance']
    criterion = SetCriterionPallas(num_classes, losses, margin=1.0)

    keys = jax.random.split(key, 8)

    # deterministic class ids; rows 2 and 4 hit the ignored (index 21) class
    class_ids = jnp.array([0, 5, 21, 3, 21, 7, 10, 1], dtype=jnp.int32)
    soft_targets = jax.nn.one_hot(class_ids, C, dtype=jnp.float32)   # [N, C]

    outputs = {
        'labels_encoder': jax.random.normal(keys[0], (N, C), jnp.float32),
        'labels_decoder': jax.random.normal(keys[1], (N, C), jnp.float32),
        'labels_x0':      jax.random.normal(keys[2], (N, C), jnp.float32),
        'labels_xt':      jax.random.normal(keys[3], (N, C), jnp.float32),
        'distance': (jax.random.normal(keys[4], (N, D), jnp.float32),
                     jax.random.normal(keys[5], (N, D), jnp.float32)),
    }
    targets = {
        'labels_encoder': soft_targets,
        'labels_decoder': soft_targets,
        'labels_x0':      soft_targets,
        'labels_xt':      soft_targets,
        'distance': jax.random.bernoulli(keys[6], 0.5, (N, 1)).astype(jnp.float32),
    }

    result = criterion(outputs, targets)
    result = jax.block_until_ready(result)

    assert set(result.keys()) == set(losses)
    for k, v in result.items():
        assert jnp.isfinite(v), f"loss {k} is not finite: {v}"

    # correctness check against a pure-JAX reference of the torch module
    for name in _LABEL_LOSS_NAMES:
        ref = _ref_label_loss(outputs[name], targets[name], criterion.ignore_index)
        assert jnp.allclose(result[name], ref, rtol=1e-4, atol=1e-5), \
            (name, result[name], ref)
    ref_d = _ref_contrastive(outputs['distance'][0], outputs['distance'][1],
                             targets['distance'], criterion.margin)
    assert jnp.allclose(result['distance'], ref_d, rtol=1e-4, atol=1e-5), \
        ('distance', result['distance'], ref_d)

    print("KERNEL_OK")
</pallas_src>

<mosaic_0001>
module attributes {stable_mosaic.version = 11 : i64} {
  func.func @kernel(%arg0: memref<8x22xf32, #tpu.memory_space<vmem>>, %arg1: memref<8x22xf32, #tpu.memory_space<vmem>>, %arg2: memref<8x22xf32, #tpu.memory_space<vmem>>, %arg3: memref<8x22xf32, #tpu.memory_space<vmem>>, %arg4: memref<8x22xf32, #tpu.memory_space<vmem>>, %arg5: memref<8x22xf32, #tpu.memory_space<vmem>>, %arg6: memref<8x22xf32, #tpu.memory_space<vmem>>, %arg7: memref<8x22xf32, #tpu.memory_space<vmem>>, %arg8: memref<8x32xf32, #tpu.memory_space<vmem>>, %arg9: memref<8x32xf32, #tpu.memory_space<vmem>>, %arg10: memref<8x1xf32, #tpu.memory_space<vmem>>, %arg11: memref<8x128xf32, #tpu.memory_space<vmem>>) attributes {dimension_semantics = [], scalar_prefetch = 0 : i64, scratch_operands = 0 : i64, tpu.core_type = #tpu.core_type<tc>} {
    %c0 = arith.constant 0 : index
    %c0_0 = arith.constant 0 : index
    %0 = vector.load %arg0[%c0, %c0_0] : memref<8x22xf32, #tpu.memory_space<vmem>>, vector<8x22xf32>
    %c0_1 = arith.constant 0 : index
    %c0_2 = arith.constant 0 : index
    %1 = vector.load %arg1[%c0_1, %c0_2] : memref<8x22xf32, #tpu.memory_space<vmem>>, vector<8x22xf32>
    %c0_3 = arith.constant 0 : index
    %c0_4 = arith.constant 0 : index
    %2 = vector.load %arg2[%c0_3, %c0_4] : memref<8x22xf32, #tpu.memory_space<vmem>>, vector<8x22xf32>
    %c0_5 = arith.constant 0 : index
    %c0_6 = arith.constant 0 : index
    %3 = vector.load %arg3[%c0_5, %c0_6] : memref<8x22xf32, #tpu.memory_space<vmem>>, vector<8x22xf32>
    %c0_7 = arith.constant 0 : index
    %c0_8 = arith.constant 0 : index
    %4 = vector.load %arg4[%c0_7, %c0_8] : memref<8x22xf32, #tpu.memory_space<vmem>>, vector<8x22xf32>
    %c0_9 = arith.constant 0 : index
    %c0_10 = arith.constant 0 : index
    %5 = vector.load %arg5[%c0_9, %c0_10] : memref<8x22xf32, #tpu.memory_space<vmem>>, vector<8x22xf32>
    %c0_11 = arith.constant 0 : index
    %c0_12 = arith.constant 0 : index
    %6 = vector.load %arg6[%c0_11, %c0_12] : memref<8x22xf32, #tpu.memory_space<vmem>>, vector<8x22xf32>
    %c0_13 = arith.constant 0 : index
    %c0_14 = arith.constant 0 : index
    %7 = vector.load %arg7[%c0_13, %c0_14] : memref<8x22xf32, #tpu.memory_space<vmem>>, vector<8x22xf32>
    %8 = tpu.concatenate %0, %2, %4, %6 in 0 : vector<8x22xf32>, vector<8x22xf32>, vector<8x22xf32>, vector<8x22xf32> -> vector<32x22xf32>
    %9 = tpu.concatenate %1, %3, %5, %7 in 0 : vector<8x22xf32>, vector<8x22xf32>, vector<8x22xf32>, vector<8x22xf32> -> vector<32x22xf32>
    %10 = tpu.iota {dimensions = array<i32: 1>} : vector<1x22xi32>
    %c21_i32 = arith.constant 21 : i32
    %11 = vector.broadcast %c21_i32 : i32 to vector<1x22xi32>
    %12 = arith.cmpi ne, %10, %11 : vector<1x22xi32>
    %cst = arith.constant 0xFF800000 : f32
    %13 = vector.shape_cast %12 : vector<1x22xi1> to vector<1x22xi1>
    %14 = vector.broadcast %13 : vector<1x22xi1> to vector<32x22xi1>
    %15 = vector.broadcast %cst : f32 to vector<32x22xf32>
    %16 = arith.select %14, %8, %15 : vector<32x22xi1>, vector<32x22xf32>
    %cst_15 = arith.constant dense<0xFF800000> : vector<32xf32>
    %17 = vector.multi_reduction <maximumf>, %16, %cst_15 [1] : vector<32x22xf32> to vector<32xf32>
    %18 = vector.shape_cast %17 : vector<32xf32> to vector<32x1xf32>
    %19 = vector.broadcast %18 : vector<32x1xf32> to vector<32x22xf32>
    %20 = arith.subf %8, %19 : vector<32x22xf32>
    %21 = math.exp %20 : vector<32x22xf32>
    %cst_16 = arith.constant 0.000000e+00 : f32
    %22 = vector.shape_cast %12 : vector<1x22xi1> to vector<1x22xi1>
    %23 = vector.broadcast %22 : vector<1x22xi1> to vector<32x22xi1>
    %24 = vector.broadcast %cst_16 : f32 to vector<32x22xf32>
    %25 = arith.select %23, %21, %24 : vector<32x22xi1>, vector<32x22xf32>
    %cst_17 = arith.constant dense<0.000000e+00> : vector<32xf32>
    %26 = vector.multi_reduction <add>, %25, %cst_17 [1] : vector<32x22xf32> to vector<32xf32>
    %27 = vector.shape_cast %26 : vector<32xf32> to vector<32x1xf32>
    %28 = math.log %27 : vector<32x1xf32>
    %29 = vector.broadcast %28 : vector<32x1xf32> to vector<32x22xf32>
    %30 = arith.subf %20, %29 : vector<32x22xf32>
    %cst_18 = arith.constant 0.000000e+00 : f32
    %31 = vector.broadcast %cst_18 : f32 to vector<32x22xf32>
    %32 = arith.subf %31, %9 : vector<32x22xf32>
    %33 = arith.mulf %32, %30 : vector<32x22xf32>
    %cst_19 = arith.constant 0.000000e+00 : f32
    %34 = vector.shape_cast %12 : vector<1x22xi1> to vector<1x22xi1>
    %35 = vector.broadcast %34 : vector<1x22xi1> to vector<32x22xi1>
    %36 = vector.broadcast %cst_19 : f32 to vector<32x22xf32>
    %37 = arith.select %35, %33, %36 : vector<32x22xi1>, vector<32x22xf32>
    %c21_i32_20 = arith.constant 21 : i32
    %38 = vector.broadcast %c21_i32_20 : i32 to vector<1x22xi32>
    %39 = arith.cmpi eq, %10, %38 : vector<1x22xi32>
    %cst_21 = arith.constant 0.000000e+00 : f32
    %40 = vector.shape_cast %39 : vector<1x22xi1> to vector<1x22xi1>
    %41 = vector.broadcast %40 : vector<1x22xi1> to vector<32x22xi1>
    %42 = vector.broadcast %cst_21 : f32 to vector<32x22xf32>
    %43 = arith.select %41, %9, %42 : vector<32x22xi1>, vector<32x22xf32>
    %cst_22 = arith.constant dense<0.000000e+00> : vector<32xf32>
    %44 = vector.multi_reduction <add>, %43, %cst_22 [1] : vector<32x22xf32> to vector<32xf32>
    %45 = vector.shape_cast %44 : vector<32xf32> to vector<32x1xf32>
    %cst_23 = arith.constant 1.000000e+00 : f32
    %46 = vector.broadcast %cst_23 : f32 to vector<32x1xf32>
    %47 = arith.cmpf one, %45, %46 : vector<32x1xf32>
    %48 = arith.extui %47 : vector<32x1xi1> to vector<32x1xi32>
    %49 = arith.sitofp %48 : vector<32x1xi32> to vector<32x1xf32>
    %cst_24 = arith.constant dense<0.000000e+00> : vector<32xf32>
    %50 = vector.multi_reduction <add>, %37, %cst_24 [1] : vector<32x22xf32> to vector<32xf32>
    %51 = vector.shape_cast %50 : vector<32xf32> to vector<32x1xf32>
    %52 = arith.mulf %51, %49 : vector<32x1xf32>
    %53 = vector.extract_strided_slice %51 {offsets = [0, 0], sizes = [8, 1], strides = [1, 1]} : vector<32x1xf32> to vector<8x1xf32>
    %54 = vector.shape_cast %53 : vector<8x1xf32> to vector<1x8x1xf32>
    %cst_25 = arith.constant dense<0.000000e+00> : vector<1xf32>
    %55 = vector.multi_reduction <add>, %54, %cst_25 [1, 2] : vector<1x8x1xf32> to vector<1xf32>
    %56 = vector.shape_cast %55 : vector<1xf32> to vector<1x1x1xf32>
    %57 = vector.extract %56[0, 0, 0] : f32 from vector<1x1x1xf32>
    %58 = vector.broadcast %57 : f32 to vector<1x1xf32>
    %59 = vector.extract_strided_slice %52 {offsets = [0, 0], sizes = [8, 1], strides = [1, 1]} : vector<32x1xf32> to vector<8x1xf32>
    %60 = vector.shape_cast %59 : vector<8x1xf32> to vector<1x8x1xf32>
    %cst_26 = arith.constant dense<0.000000e+00> : vector<1xf32>
    %61 = vector.multi_reduction <add>, %60, %cst_26 [1, 2] : vector<1x8x1xf32> to vector<1xf32>
    %62 = vector.shape_cast %61 : vector<1xf32> to vector<1x1x1xf32>
    %63 = vector.extract %62[0, 0, 0] : f32 from vector<1x1x1xf32>
    %64 = vector.broadcast %63 : f32 to vector<1x1xf32>
    %65 = vector.extract_strided_slice %49 {offsets = [0, 0], sizes = [8, 1], strides = [1, 1]} : vector<32x1xf32> to vector<8x1xf32>
    %66 = vector.shape_cast %65 : vector<8x1xf32> to vector<1x8x1xf32>
    %cst_27 = arith.constant dense<0.000000e+00> : vector<1xf32>
    %67 = vector.multi_reduction <add>, %66, %cst_27 [1, 2] : vector<1x8x1xf32> to vector<1xf32>
    %68 = vector.shape_cast %67 : vector<1xf32> to vector<1x1x1xf32>
    %69 = vector.extract %68[0, 0, 0] : f32 from vector<1x1x1xf32>
    %70 = vector.broadcast %69 : f32 to vector<1x1xf32>
    %cst_28 = arith.constant 0.000000e+00 : f32
    %71 = vector.broadcast %cst_28 : f32 to vector<1x1xf32>
    %72 = arith.cmpf oeq, %58, %71 : vector<1x1xf32>
    %73 = arith.divf %64, %70 : vector<1x1xf32>
    %cst_29 = arith.constant 0.000000e+00 : f32
    %74 = vector.broadcast %cst_29 : f32 to vector<1x1xf32>
    %75 = arith.select %72, %74, %73 : vector<1x1xi1>, vector<1x1xf32>
    %76 = vector.extract_strided_slice %51 {offsets = [8, 0], sizes = [8, 1], strides = [1, 1]} : vector<32x1xf32> to vector<8x1xf32>
    %77 = vector.shape_cast %76 : vector<8x1xf32> to vector<1x8x1xf32>
    %cst_30 = arith.constant dense<0.000000e+00> : vector<1xf32>
    %78 = vector.multi_reduction <add>, %77, %cst_30 [1, 2] : vector<1x8x1xf32> to vector<1xf32>
    %79 = vector.shape_cast %78 : vector<1xf32> to vector<1x1x1xf32>
    %80 = vector.extract %79[0, 0, 0] : f32 from vector<1x1x1xf32>
    %81 = vector.broadcast %80 : f32 to vector<1x1xf32>
    %82 = vector.extract_strided_slice %52 {offsets = [8, 0], sizes = [8, 1], strides = [1, 1]} : vector<32x1xf32> to vector<8x1xf32>
    %83 = vector.shape_cast %82 : vector<8x1xf32> to vector<1x8x1xf32>
    %cst_31 = arith.constant dense<0.000000e+00> : vector<1xf32>
    %84 = vector.multi_reduction <add>, %83, %cst_31 [1, 2] : vector<1x8x1xf32> to vector<1xf32>
    %85 = vector.shape_cast %84 : vector<1xf32> to vector<1x1x1xf32>
    %86 = vector.extract %85[0, 0, 0] : f32 from vector<1x1x1xf32>
    %87 = vector.broadcast %86 : f32 to vector<1x1xf32>
    %88 = vector.extract_strided_slice %49 {offsets = [8, 0], sizes = [8, 1], strides = [1, 1]} : vector<32x1xf32> to vector<8x1xf32>
    %89 = vector.shape_cast %88 : vector<8x1xf32> to vector<1x8x1xf32>
    %cst_32 = arith.constant dense<0.000000e+00> : vector<1xf32>
    %90 = vector.multi_reduction <add>, %89, %cst_32 [1, 2] : vector<1x8x1xf32> to vector<1xf32>
    %91 = vector.shape_cast %90 : vector<1xf32> to vector<1x1x1xf32>
    %92 = vector.extract %91[0, 0, 0] : f32 from vector<1x1x1xf32>
    %93 = vector.broadcast %92 : f32 to vector<1x1xf32>
    %cst_33 = arith.constant 0.000000e+00 : f32
    %94 = vector.broadcast %cst_33 : f32 to vector<1x1xf32>
    %95 = arith.cmpf oeq, %81, %94 : vector<1x1xf32>
    %96 = arith.divf %87, %93 : vector<1x1xf32>
    %cst_34 = arith.constant 0.000000e+00 : f32
    %97 = vector.broadcast %cst_34 : f32 to vector<1x1xf32>
    %98 = arith.select %95, %97, %96 : vector<1x1xi1>, vector<1x1xf32>
    %99 = vector.extract_strided_slice %51 {offsets = [16, 0], sizes = [8, 1], strides = [1, 1]} : vector<32x1xf32> to vector<8x1xf32>
    %100 = vector.shape_cast %99 : vector<8x1xf32> to vector<1x8x1xf32>
    %cst_35 = arith.constant dense<0.000000e+00> : vector<1xf32>
    %101 = vector.multi_reduction <add>, %100, %cst_35 [1, 2] : vector<1x8x1xf32> to vector<1xf32>
    %102 = vector.shape_cast %101 : vector<1xf32> to vector<1x1x1xf32>
    %103 = vector.extract %102[0, 0, 0] : f32 from vector<1x1x1xf32>
    %104 = vector.broadcast %103 : f32 to vector<1x1xf32>
    %105 = vector.extract_strided_slice %52 {offsets = [16, 0], sizes = [8, 1], strides = [1, 1]} : vector<32x1xf32> to vector<8x1xf32>
    %106 = vector.shape_cast %105 : vector<8x1xf32> to vector<1x8x1xf32>
    %cst_36 = arith.constant dense<0.000000e+00> : vector<1xf32>
    %107 = vector.multi_reduction <add>, %106, %cst_36 [1, 2] : vector<1x8x1xf32> to vector<1xf32>
    %108 = vector.shape_cast %107 : vector<1xf32> to vector<1x1x1xf32>
    %109 = vector.extract %108[0, 0, 0] : f32 from vector<1x1x1xf32>
    %110 = vector.broadcast %109 : f32 to vector<1x1xf32>
    %111 = vector.extract_strided_slice %49 {offsets = [16, 0], sizes = [8, 1], strides = [1, 1]} : vector<32x1xf32> to vector<8x1xf32>
    %112 = vector.shape_cast %111 : vector<8x1xf32> to vector<1x8x1xf32>
    %cst_37 = arith.constant dense<0.000000e+00> : vector<1xf32>
    %113 = vector.multi_reduction <add>, %112, %cst_37 [1, 2] : vector<1x8x1xf32> to vector<1xf32>
    %114 = vector.shape_cast %113 : vector<1xf32> to vector<1x1x1xf32>
    %115 = vector.extract %114[0, 0, 0] : f32 from vector<1x1x1xf32>
    %116 = vector.broadcast %115 : f32 to vector<1x1xf32>
    %cst_38 = arith.constant 0.000000e+00 : f32
    %117 = vector.broadcast %cst_38 : f32 to vector<1x1xf32>
    %118 = arith.cmpf oeq, %104, %117 : vector<1x1xf32>
    %119 = arith.divf %110, %116 : vector<1x1xf32>
    %cst_39 = arith.constant 0.000000e+00 : f32
    %120 = vector.broadcast %cst_39 : f32 to vector<1x1xf32>
    %121 = arith.select %118, %120, %119 : vector<1x1xi1>, vector<1x1xf32>
    %122 = vector.extract_strided_slice %51 {offsets = [24, 0], sizes = [8, 1], strides = [1, 1]} : vector<32x1xf32> to vector<8x1xf32>
    %123 = vector.shape_cast %122 : vector<8x1xf32> to vector<1x8x1xf32>
    %cst_40 = arith.constant dense<0.000000e+00> : vector<1xf32>
    %124 = vector.multi_reduction <add>, %123, %cst_40 [1, 2] : vector<1x8x1xf32> to vector<1xf32>
    %125 = vector.shape_cast %124 : vector<1xf32> to vector<1x1x1xf32>
    %126 = vector.extract %125[0, 0, 0] : f32 from vector<1x1x1xf32>
    %127 = vector.broadcast %126 : f32 to vector<1x1xf32>
    %128 = vector.extract_strided_slice %52 {offsets = [24, 0], sizes = [8, 1], strides = [1, 1]} : vector<32x1xf32> to vector<8x1xf32>
    %129 = vector.shape_cast %128 : vector<8x1xf32> to vector<1x8x1xf32>
    %cst_41 = arith.constant dense<0.000000e+00> : vector<1xf32>
    %130 = vector.multi_reduction <add>, %129, %cst_41 [1, 2] : vector<1x8x1xf32> to vector<1xf32>
    %131 = vector.shape_cast %130 : vector<1xf32> to vector<1x1x1xf32>
    %132 = vector.extract %131[0, 0, 0] : f32 from vector<1x1x1xf32>
    %133 = vector.broadcast %132 : f32 to vector<1x1xf32>
    %134 = vector.extract_strided_slice %49 {offsets = [24, 0], sizes = [8, 1], strides = [1, 1]} : vector<32x1xf32> to vector<8x1xf32>
    %135 = vector.shape_cast %134 : vector<8x1xf32> to vector<1x8x1xf32>
    %cst_42 = arith.constant dense<0.000000e+00> : vector<1xf32>
    %136 = vector.multi_reduction <add>, %135, %cst_42 [1, 2] : vector<1x8x1xf32> to vector<1xf32>
    %137 = vector.shape_cast %136 : vector<1xf32> to vector<1x1x1xf32>
    %138 = vector.extract %137[0, 0, 0] : f32 from vector<1x1x1xf32>
    %139 = vector.broadcast %138 : f32 to vector<1x1xf32>
    %cst_43 = arith.constant 0.000000e+00 : f32
    %140 = vector.broadcast %cst_43 : f32 to vector<1x1xf32>
    %141 = arith.cmpf oeq, %127, %140 : vector<1x1xf32>
    %142 = arith.divf %133, %139 : vector<1x1xf32>
    %cst_44 = arith.constant 0.000000e+00 : f32
    %143 = vector.broadcast %cst_44 : f32 to vector<1x1xf32>
    %144 = arith.select %141, %143, %142 : vector<1x1xi1>, vector<1x1xf32>
    %c0_45 = arith.constant 0 : index
    %c0_46 = arith.constant 0 : index
    %145 = vector.load %arg8[%c0_45, %c0_46] : memref<8x32xf32, #tpu.memory_space<vmem>>, vector<8x32xf32>
    %c0_47 = arith.constant 0 : index
    %c0_48 = arith.constant 0 : index
    %146 = vector.load %arg9[%c0_47, %c0_48] : memref<8x32xf32, #tpu.memory_space<vmem>>, vector<8x32xf32>
    %c0_49 = arith.constant 0 : index
    %c0_50 = arith.constant 0 : index
    %147 = vector.load %arg10[%c0_49, %c0_50] : memref<8x1xf32, #tpu.memory_space<vmem>>, vector<8x1xf32>
    %148 = arith.subf %145, %146 : vector<8x32xf32>
    %cst_51 = arith.constant 9.99999997E-7 : f32
    %149 = vector.broadcast %cst_51 : f32 to vector<8x32xf32>
    %150 = arith.addf %148, %149 : vector<8x32xf32>
    %151 = arith.mulf %150, %150 : vector<8x32xf32>
    %cst_52 = arith.constant dense<0.000000e+00> : vector<8xf32>
    %152 = vector.multi_reduction <add>, %151, %cst_52 [1] : vector<8x32xf32> to vector<8xf32>
    %153 = vector.shape_cast %152 : vector<8xf32> to vector<8x1xf32>
    %154 = math.sqrt %153 : vector<8x1xf32>
    %cst_53 = arith.constant 1.000000e+00 : f32
    %155 = vector.broadcast %cst_53 : f32 to vector<8x1xf32>
    %156 = arith.subf %155, %154 : vector<8x1xf32>
    %cst_54 = arith.constant 0.000000e+00 : f32
    %157 = vector.broadcast %cst_54 : f32 to vector<8x1xf32>
    %158 = arith.maximumf %156, %157 : vector<8x1xf32>
    %cst_55 = arith.constant 1.000000e+00 : f32
    %159 = vector.broadcast %cst_55 : f32 to vector<8x1xf32>
    %160 = arith.subf %159, %147 : vector<8x1xf32>
    %161 = arith.mulf %154, %154 : vector<8x1xf32>
    %162 = arith.mulf %160, %161 : vector<8x1xf32>
    %163 = arith.mulf %158, %158 : vector<8x1xf32>
    %164 = arith.mulf %147, %163 : vector<8x1xf32>
    %165 = arith.addf %162, %164 : vector<8x1xf32>
    %166 = vector.shape_cast %165 : vector<8x1xf32> to vector<1x8x1xf32>
    %cst_56 = arith.constant dense<0.000000e+00> : vector<1xf32>
    %167 = vector.multi_reduction <add>, %166, %cst_56 [1, 2] : vector<1x8x1xf32> to vector<1xf32>
    %168 = vector.shape_cast %167 : vector<1xf32> to vector<1x1x1xf32>
    %169 = vector.extract %168[0, 0, 0] : f32 from vector<1x1x1xf32>
    %170 = vector.broadcast %169 : f32 to vector<1x1xf32>
    %cst_57 = arith.constant 8.000000e+00 : f32
    %171 = vector.broadcast %cst_57 : f32 to vector<1x1xf32>
    %172 = arith.divf %170, %171 : vector<1x1xf32>
    %173 = tpu.iota {dimensions = array<i32: 1>} : vector<1x128xi32>
    %cst_58 = arith.constant 0.000000e+00 : f32
    %174 = vector.broadcast %cst_58 : f32 to vector<1x128xf32>
    %c0_i32 = arith.constant 0 : i32
    %175 = vector.broadcast %c0_i32 : i32 to vector<1x128xi32>
    %176 = arith.cmpi eq, %173, %175 : vector<1x128xi32>
    %177 = vector.shape_cast %75 : vector<1x1xf32> to vector<1x1xf32>
    %178 = vector.broadcast %177 : vector<1x1xf32> to vector<1x128xf32>
    %179 = arith.select %176, %178, %174 : vector<1x128xi1>, vector<1x128xf32>
    %c1_i32 = arith.constant 1 : i32
    %180 = vector.broadcast %c1_i32 : i32 to vector<1x128xi32>
    %181 = arith.cmpi eq, %173, %180 : vector<1x128xi32>
    %182 = vector.shape_cast %98 : vector<1x1xf32> to vector<1x1xf32>
    %183 = vector.broadcast %182 : vector<1x1xf32> to vector<1x128xf32>
    %184 = arith.select %181, %183, %179 : vector<1x128xi1>, vector<1x128xf32>
    %c2_i32 = arith.constant 2 : i32
    %185 = vector.broadcast %c2_i32 : i32 to vector<1x128xi32>
    %186 = arith.cmpi eq, %173, %185 : vector<1x128xi32>
    %187 = vector.shape_cast %121 : vector<1x1xf32> to vector<1x1xf32>
    %188 = vector.broadcast %187 : vector<1x1xf32> to vector<1x128xf32>
    %189 = arith.select %186, %188, %184 : vector<1x128xi1>, vector<1x128xf32>
    %c3_i32 = arith.constant 3 : i32
    %190 = vector.broadcast %c3_i32 : i32 to vector<1x128xi32>
    %191 = arith.cmpi eq, %173, %190 : vector<1x128xi32>
    %192 = vector.shape_cast %144 : vector<1x1xf32> to vector<1x1xf32>
    %193 = vector.broadcast %192 : vector<1x1xf32> to vector<1x128xf32>
    %194 = arith.select %191, %193, %189 : vector<1x128xi1>, vector<1x128xf32>
    %c4_i32 = arith.constant 4 : i32
    %195 = vector.broadcast %c4_i32 : i32 to vector<1x128xi32>
    %196 = arith.cmpi eq, %173, %195 : vector<1x128xi32>
    %197 = vector.shape_cast %172 : vector<1x1xf32> to vector<1x1xf32>
    %198 = vector.broadcast %197 : vector<1x1xf32> to vector<1x128xf32>
    %199 = arith.select %196, %198, %194 : vector<1x128xi1>, vector<1x128xf32>
    %200 = vector.shape_cast %199 : vector<1x128xf32> to vector<1x128xf32>
    %201 = vector.broadcast %200 : vector<1x128xf32> to vector<8x128xf32>
    %c0_59 = arith.constant 0 : index
    %c0_60 = arith.constant 0 : index
    %202 = vector.load %arg11[%c0_59, %c0_60] : memref<8x128xf32, #tpu.memory_space<vmem>>, vector<8x128xf32>
    tpu.vector_store %arg11[%c0_59, %c0_60], %201 {strides = array<i32>} : memref<8x128xf32, #tpu.memory_space<vmem>>, vector<8x128xf32>,
    return
  }
}

</mosaic_0001>

<llo_original>
// kernel: tpu_custom_call.1
$region0: #{tpu_custom_call.1}
  #allocation0 [shape = 'u32[]', space=smem, size = 0x4, offset = 0x4, fixed_abs, tag = 'smem constant byte address 0x4 - core index']
  #allocation1 [shape = 'u32[144,128]{1,0:T(1,128)}', space=vmem, size = 0x12000, scoped, tag = 'internal scratch']
  %s0 = inlined_call_operand.vmem [shape: f32[8,22], index: 0, kind: input, shape index: {}]
  %s1 = inlined_call_operand.hbm [shape: f32[8,22], index: 1, kind: input, shape index: {}]
  %s2 = inlined_call_operand.vmem [shape: f32[8,22], index: 2, kind: input, shape index: {}]
  %s3 = inlined_call_operand.hbm [shape: f32[8,22], index: 3, kind: input, shape index: {}]
  %s4 = inlined_call_operand.vmem [shape: f32[8,22], index: 4, kind: input, shape index: {}]
  %s5 = inlined_call_operand.hbm [shape: f32[8,22], index: 5, kind: input, shape index: {}]
  %s6 = inlined_call_operand.hbm [shape: f32[8,22], index: 6, kind: input, shape index: {}]
  %s7 = inlined_call_operand.vmem [shape: f32[8,22], index: 7, kind: input, shape index: {}]
  %s8 = inlined_call_operand.hbm [shape: f32[8,32], index: 8, kind: input, shape index: {}]
  %s9 = inlined_call_operand.vmem [shape: f32[8,32], index: 9, kind: input, shape index: {}]
  %s10 = inlined_call_operand.vmem [shape: f32[8,1], index: 10, kind: input, shape index: {}]
  %s11 = inlined_call_operand.hbm [shape: f32[8,128], index: 11, kind: output, shape index: {}]
  %s12 = sld [smem:[#allocation0]]
  $region74: #{tpu_custom_call.1} parent=0
    _
  %s14 = ssub.s32 1, %s12
  %s15 = scalar_select 0, %s14, %s12
  $region1: #{tpu_custom_call.1} parent=0
    #allocation2 [shape = 'u8[4096]{0}', space=vmem, size = 0x1000, scoped, tag = 'input window, operand 1, single buffered']
    #allocation3 [shape = 's32[1]{0}', space=sflag, size = 0x4, scoped, tag = 'scoped memory for tpu_custom_call.1']
    #allocation4 [shape = 's32[1]{0}', space=sflag, size = 0x4, scoped, tag = 'scoped memory for tpu_custom_call.1']
    #allocation5 [shape = 'u8[4096]{0}', space=vmem, size = 0x1000, scoped, tag = 'input window, operand 3, single buffered']
    #allocation6 [shape = 's32[1]{0}', space=sflag, size = 0x4, scoped, tag = 'scoped memory for tpu_custom_call.1']
    #allocation7 [shape = 'u8[4096]{0}', space=vmem, size = 0x1000, scoped, tag = 'input window, operand 5, single buffered']
    #allocation8 [shape = 'u8[4096]{0}', space=vmem, size = 0x1000, scoped, tag = 'input window, operand 6, single buffered']
    #allocation9 [shape = 's32[1]{0}', space=sflag, size = 0x4, scoped, tag = 'scoped memory for tpu_custom_call.1']
    #allocation10 [shape = 'u8[4096]{0}', space=vmem, size = 0x1000, scoped, tag = 'input window, operand 8, single buffered']
    #allocation11 [shape = 'u8[4096]{0}', space=vmem, size = 0x1000, scoped, tag = 'output window, operand 0, single buffered']
    %16 = vsyncpa [#allocation3], 0
    %17 = vsyncpa [#allocation6], 0
    %18 = vsyncpa [#allocation9], 0
    %19 = vsyncpa [#allocation4], 0
    // Predicated region
    $region2: #{tpu_custom_call.1} parent=1 // pred_check
      _
    $region3: #{tpu_custom_call.1} parent=1 // pred_check_branch
      %21 = sbr.rel (0) target = $region5
    $region4: #{tpu_custom_call.1} parent=1 // pred_region
      _
    $region5: #{tpu_custom_call.1} parent=1 // pred_fallthru
      _
    // Predicated region
    $region6: #{tpu_custom_call.1} parent=1 // pred_check
      _
    $region7: #{tpu_custom_call.1} parent=1 // pred_check_branch
      %23 = sbr.rel (0) target = $region9
    $region8: #{tpu_custom_call.1} parent=1 // pred_region
      %s25 = ssub.s32 128, 128
      %26 = vsyncadd [#allocation3], %s25
      %s28 = sshll.u32 [#allocation2], 4
      %s29 = int_to_ptr.vmem [resolvable:$true] %s28
      %31 = dma.hbm_to_vmem [thread:$0]  %s1, 128, %s29, [#allocation3]
    $region9: #{tpu_custom_call.1} parent=1 // pred_fallthru
      _
    // Predicated region
    $region10: #{tpu_custom_call.1} parent=1 // pred_check
      _
    $region11: #{tpu_custom_call.1} parent=1 // pred_check_branch
      %33 = sbr.rel (0) target = $region13
    $region12: #{tpu_custom_call.1} parent=1 // pred_region
      _
    $region13: #{tpu_custom_call.1} parent=1 // pred_fallthru
      _
    // Predicated region
    $region14: #{tpu_custom_call.1} parent=1 // pred_check
      _
    $region15: #{tpu_custom_call.1} parent=1 // pred_check_branch
      %35 = sbr.rel (0) target = $region17
    $region16: #{tpu_custom_call.1} parent=1 // pred_region
      %s37 = ssub.s32 128, 128
      %38 = vsyncadd [#allocation6], %s37
      %s40 = sshll.u32 [#allocation5], 4
      %s41 = int_to_ptr.vmem [resolvable:$true] %s40
      %43 = dma.hbm_to_vmem [thread:$0]  %s3, 128, %s41, [#allocation6]
    $region17: #{tpu_custom_call.1} parent=1 // pred_fallthru
      _
    // Predicated region
    $region18: #{tpu_custom_call.1} parent=1 // pred_check
      _
    $region19: #{tpu_custom_call.1} parent=1 // pred_check_branch
      %45 = sbr.rel (0) target = $region21
    $region20: #{tpu_custom_call.1} parent=1 // pred_region
      _
    $region21: #{tpu_custom_call.1} parent=1 // pred_fallthru
      _
    // Predicated region
    $region22: #{tpu_custom_call.1} parent=1 // pred_check
      _
    $region23: #{tpu_custom_call.1} parent=1 // pred_check_branch
      %47 = sbr.rel (0) target = $region25
    $region24: #{tpu_custom_call.1} parent=1 // pred_region
      %s49 = ssub.s32 128, 128
      %50 = vsyncadd [#allocation6], %s49
      %s52 = sshll.u32 [#allocation7], 4
      %s53 = int_to_ptr.vmem [resolvable:$true] %s52
      %55 = dma.hbm_to_vmem [thread:$0]  %s5, 128, %s53, [#allocation6]
    $region25: #{tpu_custom_call.1} parent=1 // pred_fallthru
      _
    // Predicated region
    $region26: #{tpu_custom_call.1} parent=1 // pred_check
      _
    $region27: #{tpu_custom_call.1} parent=1 // pred_check_branch
      %57 = sbr.rel (0) target = $region29
    $region28: #{tpu_custom_call.1} parent=1 // pred_region
      %s59 = ssub.s32 128, 128
      %60 = vsyncadd [#allocation9], %s59
      %s62 = sshll.u32 [#allocation8], 4
      %s63 = int_to_ptr.vmem [resolvable:$true] %s62
      %65 = dma.hbm_to_vmem [thread:$0]  %s6, 128, %s63, [#allocation9]
    $region29: #{tpu_custom_call.1} parent=1 // pred_fallthru
      _
    // Predicated region
    $region30: #{tpu_custom_call.1} parent=1 // pred_check
      _
    $region31: #{tpu_custom_call.1} parent=1 // pred_check_branch
      %67 = sbr.rel (0) target = $region33
    $region32: #{tpu_custom_call.1} parent=1 // pred_region
      _
    $region33: #{tpu_custom_call.1} parent=1 // pred_fallthru
      _
    // Predicated region
    $region34: #{tpu_custom_call.1} parent=1 // pred_check
      _
    $region35: #{tpu_custom_call.1} parent=1 // pred_check_branch
      %69 = sbr.rel (0) target = $region37
    $region36: #{tpu_custom_call.1} parent=1 // pred_region
      %s71 = ssub.s32 128, 128
      %72 = vsyncadd [#allocation9], %s71
      %s74 = sshll.u32 [#allocation10], 4
      %s75 = int_to_ptr.vmem [resolvable:$true] %s74
      %77 = dma.hbm_to_vmem [thread:$0]  %s8, 128, %s75, [#allocation9]
    $region37: #{tpu_custom_call.1} parent=1 // pred_fallthru
      _
    // Predicated region
    $region38: #{tpu_custom_call.1} parent=1 // pred_check
      _
    $region39: #{tpu_custom_call.1} parent=1 // pred_check_branch
      %79 = sbr.rel (0) target = $region41
    $region40: #{tpu_custom_call.1} parent=1 // pred_region
      _
    $region41: #{tpu_custom_call.1} parent=1 // pred_fallthru
      _
    // Predicated region
    $region42: #{tpu_custom_call.1} parent=1 // pred_check
      _
    $region43: #{tpu_custom_call.1} parent=1 // pred_check_branch
      %81 = sbr.rel (0) target = $region45
    $region44: #{tpu_custom_call.1} parent=1 // pred_region
      _
    $region45: #{tpu_custom_call.1} parent=1 // pred_fallthru
      _
    // Predicated region
    $region46: #{tpu_custom_call.1} parent=1 // pred_check
      _
    $region47: #{tpu_custom_call.1} parent=1 // pred_check_branch
      %83 = sbr.rel (0) target = $region49
    $region48: #{tpu_custom_call.1} parent=1 // pred_region
      %84 = dma.done [#allocation3], 128
    $region49: #{tpu_custom_call.1} parent=1 // pred_fallthru
      _
    // Predicated region
    $region50: #{tpu_custom_call.1} parent=1 // pred_check
      _
    $region51: #{tpu_custom_call.1} parent=1 // pred_check_branch
      %86 = sbr.rel (0) target = $region53
    $region52: #{tpu_custom_call.1} parent=1 // pred_region
      %87 = dma.done [#allocation6], 128
    $region53: #{tpu_custom_call.1} parent=1 // pred_fallthru
      _
    // Predicated region
    $region54: #{tpu_custom_call.1} parent=1 // pred_check
      _
    $region55: #{tpu_custom_call.1} parent=1 // pred_check_branch
      %89 = sbr.rel (0) target = $region57
    $region56: #{tpu_custom_call.1} parent=1 // pred_region
      %90 = dma.done [#allocation6], 128
    $region57: #{tpu_custom_call.1} parent=1 // pred_fallthru
      _
    // Predicated region
    $region58: #{tpu_custom_call.1} parent=1 // pred_check
      _
    $region59: #{tpu_custom_call.1} parent=1 // pred_check_branch
      %92 = sbr.rel (0) target = $region61
    $region60: #{tpu_custom_call.1} parent=1 // pred_region
      %93 = dma.done [#allocation9], 128
    $region61: #{tpu_custom_call.1} parent=1 // pred_fallthru
      _
    // Predicated region
    $region62: #{tpu_custom_call.1} parent=1 // pred_check
      _
    $region63: #{tpu_custom_call.1} parent=1 // pred_check_branch
      %95 = sbr.rel (0) target = $region65
    $region64: #{tpu_custom_call.1} parent=1 // pred_region
      %96 = dma.done [#allocation9], 128
    $region65: #{tpu_custom_call.1} parent=1 // pred_fallthru
      _
    %v97 = vld [vmem:[%s0] sm:$0xff]
    %v98 = vld [vmem:[#allocation2] sm:$0xff]
    %v99 = vld [vmem:[%s2] sm:$0xff]
    %v100 = vld [vmem:[#allocation5] sm:$0xff]
    %v101 = vld [vmem:[%s4] sm:$0xff]
    %v102 = vld [vmem:[#allocation7] sm:$0xff]
    %v103 = vld [vmem:[#allocation8] sm:$0xff]
    %v104 = vld [vmem:[%s7] sm:$0xff]
    %v105 = vlaneseq
    %v106 = vand.u32 %v105, 127
    %vm107 = vcmp.ne.s32.totalorder %v106, 21
    %v108 = vsel %vm107, 1, 0
    %vm109 = vcmp.eq.s32.totalorder %v108, 1
    %v110 = vsel %vm109, %v97, -inf
    %v111 = vsel %vm109, %v99, -inf
    %v112 = vsel %vm109, %v101, -inf
    %v113 = vsel %vm109, %v103, -inf
    %vm114 = vcmask 179200
    %v115 = vsel %vm114, %v110, -inf
    %116 = vmax.xlane.f32.xlu0 %v115
    %v117 = vpop.xlane.xlu0 %116
    %v118 = vsel %vm114, %v111, -inf
    %119 = vmax.xlane.f32.xlu0 %v118
    %v120 = vpop.xlane.xlu0 %119
    %v121 = vsel %vm114, %v112, -inf
    %122 = vmax.xlane.f32.xlu0 %v121
    %v123 = vpop.xlane.xlu0 %122
    %v124 = vsel %vm114, %v113, -inf
    %125 = vmax.xlane.f32.xlu0 %v124
    %v126 = vpop.xlane.xlu0 %125
    %v127 = vsub.f32 %v97, %v117
    %v128 = vsub.f32 %v99, %v120
    %v129 = vsub.f32 %v101, %v123
    %v130 = vsub.f32 %v103, %v126
    %v131 = vmul.f32 %v127, 1.442695
    %v132 = vpow.pop %v131
    %v133 = vmul.f32 %v128, 1.442695
    %v134 = vpow.pop %v133
    %v135 = vmul.f32 %v129, 1.442695
    %v136 = vpow.pop %v135
    %v137 = vmul.f32 %v130, 1.442695
    %v138 = vpow.pop %v137
    %v139 = vsel %vm109, %v132, 0.0
    %v140 = vsel %vm109, %v134, 0.0
    %v141 = vsel %vm109, %v136, 0.0
    %v142 = vsel %vm109, %v138, 0.0
    %v143 = vsel %vm114, %v139, 0.0
    %144 = vadd.xlane.f32.xlu0 %v143
    %v145 = vpop.xlane.xlu0 %144
    %v146 = vsel %vm114, %v140, 0.0
    %147 = vadd.xlane.f32.xlu0 %v146
    %v148 = vpop.xlane.xlu0 %147
    %v149 = vsel %vm114, %v141, 0.0
    %150 = vadd.xlane.f32.xlu0 %v149
    %v151 = vpop.xlane.xlu0 %150
    %v152 = vsel %vm114, %v142, 0.0
    %153 = vadd.xlane.f32.xlu0 %v152
    %v154 = vpop.xlane.xlu0 %153
    %v155 = vlog2.pop %v145
    %v156 = vmul.f32 %v155, 0.6931472
    %v157 = vlog2.pop %v148
    %v158 = vmul.f32 %v157, 0.6931472
    %v159 = vlog2.pop %v151
    %v160 = vmul.f32 %v159, 0.6931472
    %v161 = vlog2.pop %v154
    %v162 = vmul.f32 %v161, 0.6931472
    %v163 = vsub.f32 %v127, %v156
    %v164 = vsub.f32 %v128, %v158
    %v165 = vsub.f32 %v129, %v160
    %v166 = vsub.f32 %v130, %v162
    %v167 = vsub.f32 0.0, %v98
    %v168 = vsub.f32 0.0, %v100
    %v169 = vsub.f32 0.0, %v102
    %v170 = vsub.f32 0.0, %v104
    %v171 = vmul.f32 %v167, %v163
    %v172 = vmul.f32 %v168, %v164
    %v173 = vmul.f32 %v169, %v165
    %v174 = vmul.f32 %v170, %v166
    %v175 = vsel %vm109, %v171, 0.0
    %v176 = vsel %vm109, %v172, 0.0
    %v177 = vsel %vm109, %v173, 0.0
    %v178 = vsel %vm109, %v174, 0.0
    %vm179 = vcmp.eq.s32.totalorder %v106, 21
    %v180 = vsel %vm179, 1, 0
    %vm181 = vcmp.eq.s32.totalorder %v180, 1
    %v182 = vsel %vm181, %v98, 0.0
    %v183 = vsel %vm181, %v100, 0.0
    %v184 = vsel %vm181, %v102, 0.0
    %v185 = vsel %vm181, %v104, 0.0
    %v186 = vsel %vm114, %v182, 0.0
    %187 = vadd.xlane.f32.xlu0 %v186
    %v188 = vpop.xlane.xlu0 %187
    %v189 = vsel %vm114, %v183, 0.0
    %190 = vadd.xlane.f32.xlu0 %v189
    %v191 = vpop.xlane.xlu0 %190
    %v192 = vsel %vm114, %v184, 0.0
    %193 = vadd.xlane.f32.xlu0 %v192
    %v194 = vpop.xlane.xlu0 %193
    %v195 = vsel %vm114, %v185, 0.0
    %196 = vadd.xlane.f32.xlu0 %v195
    %v197 = vpop.xlane.xlu0 %196
    %vm198 = vcmp.ne.f32.partialorder %v188, 1.0
    %vm199 = vcmp.ne.f32.partialorder %v191, 1.0
    %vm200 = vcmp.ne.f32.partialorder %v194, 1.0
    %vm201 = vcmp.ne.f32.partialorder %v197, 1.0
    %v202 = vsel %vm198, 1, 0
    %v203 = vsel %vm199, 1, 0
    %v204 = vsel %vm200, 1, 0
    %v205 = vsel %vm201, 1, 0
    %v206 = vcvt.s32.f32 %v202
    %v207 = vcvt.s32.f32 %v203
    %v208 = vcvt.s32.f32 %v204
    %v209 = vcvt.s32.f32 %v205
    %v210 = vsel %vm114, %v175, 0.0
    %211 = vadd.xlane.f32.xlu0 %v210
    %v212 = vpop.xlane.xlu0 %211
    %v213 = vsel %vm114, %v176, 0.0
    %214 = vadd.xlane.f32.xlu0 %v213
    %v215 = vpop.xlane.xlu0 %214
    %v216 = vsel %vm114, %v177, 0.0
    %217 = vadd.xlane.f32.xlu0 %v216
    %v218 = vpop.xlane.xlu0 %217
    %v219 = vsel %vm114, %v178, 0.0
    %220 = vadd.xlane.f32.xlu0 %v219
    %v221 = vpop.xlane.xlu0 %220
    %v222 = vmul.f32 %v212, %v206
    %v223 = vmul.f32 %v215, %v207
    %v224 = vmul.f32 %v218, %v208
    %v225 = vmul.f32 %v221, %v209
    %vm226 = vcmask 7168
    %v227 = vsel %vm226, %v212, 0.0
    %228 = vadd.xlane.f32.xlu0 %v227
    %v229 = vpop.xlane.xlu0 %228
    %v230 = vrot.slane %v229, 4
    %v231 = vadd.f32 %v229, %v230
    %v232 = vrot.slane %v231, 2
    %v233 = vadd.f32 %v231, %v232
    %v234 = vrot.slane %v233, 1
    %v235 = vadd.f32 %v233, %v234
    %s236 = vtos %v235
    %v237 = vstv %s236
    %v238 = vsel %vm226, %v222, 0.0
    %239 = vadd.xlane.f32.xlu0 %v238
    %v240 = vpop.xlane.xlu0 %239
    %v241 = vrot.slane %v240, 4
    %v242 = vadd.f32 %v240, %v241
    %v243 = vrot.slane %v242, 2
    %v244 = vadd.f32 %v242, %v243
    %v245 = vrot.slane %v244, 1
    %v246 = vadd.f32 %v244, %v245
    %s247 = vtos %v246
    %v248 = vstv %s247
    %v249 = vsel %vm226, %v206, 0.0
    %250 = vadd.xlane.f32.xlu0 %v249
    %v251 = vpop.xlane.xlu0 %250
    %v252 = vrot.slane %v251, 4
    %v253 = vadd.f32 %v251, %v252
    %v254 = vrot.slane %v253, 2
    %v255 = vadd.f32 %v253, %v254
    %v256 = vrot.slane %v255, 1
    %v257 = vadd.f32 %v255, %v256
    %s258 = vtos %v257
    %v259 = vstv %s258
    %vm260 = vcmp.eq.f32.partialorder %v237, 0.0
    %v261 = vrcp.pop %v259
    %v262 = vmul.f32 %v248, %v261
    %v263 = vsel %vm260, 0.0, %v262
    %v264 = vsel %vm226, %v215, 0.0
    %265 = vadd.xlane.f32.xlu0 %v264
    %v266 = vpop.xlane.xlu0 %265
    %v267 = vrot.slane %v266, 4
    %v268 = vadd.f32 %v266, %v267
    %v269 = vrot.slane %v268, 2
    %v270 = vadd.f32 %v268, %v269
    %v271 = vrot.slane %v270, 1
    %v272 = vadd.f32 %v270, %v271
    %s273 = vtos %v272
    %v274 = vstv %s273
    %v275 = vsel %vm226, %v223, 0.0
    %276 = vadd.xlane.f32.xlu0 %v275
    %v277 = vpop.xlane.xlu0 %276
    %v278 = vrot.slane %v277, 4
    %v279 = vadd.f32 %v277, %v278
    %v280 = vrot.slane %v279, 2
    %v281 = vadd.f32 %v279, %v280
    %v282 = vrot.slane %v281, 1
    %v283 = vadd.f32 %v281, %v282
    %s284 = vtos %v283
    %v285 = vstv %s284
    %v286 = vsel %vm226, %v207, 0.0
    %287 = vadd.xlane.f32.xlu0 %v286
    %v288 = vpop.xlane.xlu0 %287
    %v289 = vrot.slane %v288, 4
    %v290 = vadd.f32 %v288, %v289
    %v291 = vrot.slane %v290, 2
    %v292 = vadd.f32 %v290, %v291
    %v293 = vrot.slane %v292, 1
    %v294 = vadd.f32 %v292, %v293
    %s295 = vtos %v294
    %v296 = vstv %s295
    %vm297 = vcmp.eq.f32.partialorder %v274, 0.0
    %v298 = vrcp.pop %v296
    %v299 = vmul.f32 %v285, %v298
    %v300 = vsel %vm297, 0.0, %v299
    %v301 = vsel %vm226, %v218, 0.0
    %302 = vadd.xlane.f32.xlu0 %v301
    %v303 = vpop.xlane.xlu0 %302
    %v304 = vrot.slane %v303, 4
    %v305 = vadd.f32 %v303, %v304
    %v306 = vrot.slane %v305, 2
    %v307 = vadd.f32 %v305, %v306
    %v308 = vrot.slane %v307, 1
    %v309 = vadd.f32 %v307, %v308
    %s310 = vtos %v309
    %v311 = vstv %s310
    %v312 = vsel %vm226, %v224, 0.0
    %313 = vadd.xlane.f32.xlu0 %v312
    %v314 = vpop.xlane.xlu0 %313
    %v315 = vrot.slane %v314, 4
    %v316 = vadd.f32 %v314, %v315
    %v317 = vrot.slane %v316, 2
    %v318 = vadd.f32 %v316, %v317
    %v319 = vrot.slane %v318, 1
    %v320 = vadd.f32 %v318, %v319
    %s321 = vtos %v320
    %v322 = vstv %s321
    %v323 = vsel %vm226, %v208, 0.0
    %324 = vadd.xlane.f32.xlu0 %v323
    %v325 = vpop.xlane.xlu0 %324
    %v326 = vrot.slane %v325, 4
    %v327 = vadd.f32 %v325, %v326
    %v328 = vrot.slane %v327, 2
    %v329 = vadd.f32 %v327, %v328
    %v330 = vrot.slane %v329, 1
    %v331 = vadd.f32 %v329, %v330
    %s332 = vtos %v331
    %v333 = vstv %s332
    %vm334 = vcmp.eq.f32.partialorder %v311, 0.0
    %v335 = vrcp.pop %v333
    %v336 = vmul.f32 %v322, %v335
    %v337 = vsel %vm334, 0.0, %v336
    %v338 = vsel %vm226, %v221, 0.0
    %339 = vadd.xlane.f32.xlu0 %v338
    %v340 = vpop.xlane.xlu0 %339
    %v341 = vrot.slane %v340, 4
    %v342 = vadd.f32 %v340, %v341
    %v343 = vrot.slane %v342, 2
    %v344 = vadd.f32 %v342, %v343
    %v345 = vrot.slane %v344, 1
    %v346 = vadd.f32 %v344, %v345
    %s347 = vtos %v346
    %v348 = vstv %s347
    %v349 = vsel %vm226, %v225, 0.0
    %350 = vadd.xlane.f32.xlu0 %v349
    %v351 = vpop.xlane.xlu0 %350
    %v352 = vrot.slane %v351, 4
    %v353 = vadd.f32 %v351, %v352
    %v354 = vrot.slane %v353, 2
    %v355 = vadd.f32 %v353, %v354
    %v356 = vrot.slane %v355, 1
    %v357 = vadd.f32 %v355, %v356
    %s358 = vtos %v357
    %v359 = vstv %s358
    %v360 = vsel %vm226, %v209, 0.0
    %361 = vadd.xlane.f32.xlu0 %v360
    %v362 = vpop.xlane.xlu0 %361
    %v363 = vrot.slane %v362, 4
    %v364 = vadd.f32 %v362, %v363
    %v365 = vrot.slane %v364, 2
    %v366 = vadd.f32 %v364, %v365
    %v367 = vrot.slane %v366, 1
    %v368 = vadd.f32 %v366, %v367
    %s369 = vtos %v368
    %v370 = vstv %s369
    %vm371 = vcmp.eq.f32.partialorder %v348, 0.0
    %v372 = vrcp.pop %v370
    %v373 = vmul.f32 %v359, %v372
    %v374 = vsel %vm371, 0.0, %v373
    %v375 = vld [vmem:[#allocation10] sm:$0xff]
    %v376 = vld [vmem:[%s9] sm:$0xff]
    %v377 = vld [vmem:[%s10] sm:$0xff]
    %v378 = vsub.f32 %v375, %v376
    %v379 = vadd.f32 %v378, 1e-06
    %v380 = vmul.f32 %v379, %v379
    %vm381 = vcmask 261120
    %v382 = vsel %vm381, %v380, 0.0
    %383 = vadd.xlane.f32.xlu0 %v382
    %v384 = vpop.xlane.xlu0 %383
    %v385 = vrsqrt.pop %v384
    %v386 = vmul.f32 %v384, %v385
    %vm387 = vcmp.eq.f32.partialorder %v384, inf
    %v388 = vsel %vm387, %v384, %v386
    %vm389 = vcmp.eq.f32.partialorder %v384, 0.0
    %v390 = vand.u32 %v384, 2147483648
    %v391 = vsel %vm389, %v390, %v388
    %v392 = vsub.f32 1.0, %v391
    %v393 = vmax.f32 %v392, 0.0
    %v394 = vsub.f32 1.0, %v377
    %v395 = vmul.f32 %v391, %v391
    %v396 = vmul.f32 %v394, %v395
    %v397 = vmul.f32 %v393, %v393
    %v398 = vmul.f32 %v377, %v397
    %v399 = vadd.f32 %v396, %v398
    %v400 = vsel %vm226, %v399, 0.0
    %401 = vadd.xlane.f32.xlu0 %v400
    %v402 = vpop.xlane.xlu0 %401
    %v403 = vrot.slane %v402, 4
    %v404 = vadd.f32 %v402, %v403
    %v405 = vrot.slane %v404, 2
    %v406 = vadd.f32 %v404, %v405
    %v407 = vrot.slane %v406, 1
    %v408 = vadd.f32 %v406, %v407
    %s409 = vtos %v408
    %v410 = vstv %s409
    %v411 = vrcp.pop 8.0
    %v412 = vmul.f32 %v410, %v411
    %vm413 = vcmp.eq.s32.totalorder %v106, 0
    %v414 = vsel %vm413, %v263, 0.0
    %vm415 = vcmp.eq.s32.totalorder %v106, 1
    %v416 = vsel %vm415, %v300, %v414
    %vm417 = vcmp.eq.s32.totalorder %v106, 2
    %v418 = vsel %vm417, %v337, %v416
    %vm419 = vcmp.eq.s32.totalorder %v106, 3
    %v420 = vsel %vm419, %v374, %v418
    %vm421 = vcmp.eq.s32.totalorder %v106, 4
    %v422 = vsel %vm421, %v412, %v420
    %423 = vst [vmem:[#allocation11] sm:$0xff] %v422
    // Predicated region
    $region66: #{tpu_custom_call.1} parent=1 // pred_check
      _
    $region67: #{tpu_custom_call.1} parent=1 // pred_check_branch
      %425 = sbr.rel (0) target = $region69
    $region68: #{tpu_custom_call.1} parent=1 // pred_region
      %s427 = ssub.s32 128, 128
      %428 = vsyncadd [#allocation4], %s427
      %s430 = sshll.u32 [#allocation11], 4
      %s431 = int_to_ptr.vmem [resolvable:$true] %s430
      %433 = dma.vmem_to_hbm [thread:$0]  %s431, 128, %s11, [#allocation4]
    $region69: #{tpu_custom_call.1} parent=1 // pred_fallthru
      _
    // Predicated region
    $region70: #{tpu_custom_call.1} parent=1 // pred_check
      _
    $region71: #{tpu_custom_call.1} parent=1 // pred_check_branch
      %435 = sbr.rel (0) target = $region73
    $region72: #{tpu_custom_call.1} parent=1 // pred_region
      %436 = dma.done [#allocation4], 128
    $region73: #{tpu_custom_call.1} parent=1 // pred_fallthru
      _
    %437 = vsyncpa [#allocation3], 1
    %438 = vsyncpa [#allocation6], 1
    %439 = vsyncpa [#allocation9], 1
    %440 = vsyncpa [#allocation4], 1

</llo_original>
